<compile_context>
chip_gen: v5e
topology: v5e:2x2
jax: 0.10.0
libtpu: 0.0.40
codegen_flags: <defaults>
</compile_context>

<pallas_src>
import jax
import jax.numpy as jnp
from jax.experimental import pallas as pl
from jax.experimental.pallas import tpu as pltpu

B = 2
L = 28                 # sequence length -> 3 * 28 = 84 features into fc1
C1 = 32                # conv1 out channels
C2 = 3                 # conv2 out channels
H1 = 250               # fc1 hidden size (logical)
H1PAD = 256            # lane-dense padded hidden size
PRED_HORIZON = 14
EPS = 1e-5


# ------------------------------ Pallas kernel -------------------------------

def _fused_forward_kernel(x_ref, w1_ref, t1_ref, w2_ref, t2_ref,
                          fc1w_ref, fc1b_ref, fc2w_ref, fc2b_ref, o_ref):
    f32 = jnp.float32
    x = x_ref[...]                                                    # (B, L)

    # conv1 + BN1 + ReLU as ONE banded matmul -> (B, C1*L); columns are channel-major
    # (c*L + l), i.e. already in PyTorch flatten order. Zero 'same'-padding is baked
    # into the band structure of w1big at prep time.
    h1 = jnp.dot(x, w1_ref[...], preferred_element_type=f32) + t1_ref[...]
    h1 = jnp.maximum(h1, 0.0)

    # conv2 + BN2 + ReLU as ONE banded matmul -> (B, C2*L) == x.view(B, -1) directly.
    h2 = jnp.dot(h1, w2_ref[...], preferred_element_type=f32) + t2_ref[...]
    h2 = jnp.maximum(h2, 0.0)

    # fc1: single K=84 contraction batched over B (H1 zero-padded to 256 lanes), ReLU.
    z1 = jnp.dot(h2, fc1w_ref[...], preferred_element_type=f32) + fc1b_ref[...]
    z1 = jnp.maximum(z1, 0.0)

    # fc2 -> single (B, 14) store.
    o_ref[...] = jnp.dot(z1, fc2w_ref[...], preferred_element_type=f32) + fc2b_ref[...]


# ------------------------------- JAX glue -----------------------------------

def init_params(key):
    ks = jax.random.split(key, 8)
    p = {}
    p["conv1_w"] = 0.1 * jax.random.normal(ks[0], (C1, 1, 3), jnp.float32)
    p["conv1_b"] = 0.1 * jax.random.normal(ks[1], (C1,), jnp.float32)
    p["conv2_w"] = 0.1 * jax.random.normal(ks[2], (C2, C1, 3), jnp.float32)
    p["conv2_b"] = 0.1 * jax.random.normal(ks[3], (C2,), jnp.float32)
    p["fc1_w"] = 0.1 * jax.random.normal(ks[4], (H1, C2 * L), jnp.float32)
    p["fc1_b"] = 0.1 * jax.random.normal(ks[5], (H1,), jnp.float32)
    p["fc2_w"] = 0.1 * jax.random.normal(ks[6], (PRED_HORIZON, H1), jnp.float32)
    p["fc2_b"] = 0.1 * jax.random.normal(ks[7], (PRED_HORIZON,), jnp.float32)
    # BatchNorm1d params at PyTorch defaults, evaluated with inference (running-stats)
    # semantics. TODO(synk): train-mode BatchNorm (per-batch statistics) not implemented.
    for name, c in (("bn1", C1), ("bn2", C2)):
        p[f"{name}_gamma"] = jnp.ones((c,), jnp.float32)
        p[f"{name}_beta"] = jnp.zeros((c,), jnp.float32)
        p[f"{name}_mean"] = jnp.zeros((c,), jnp.float32)
        p[f"{name}_var"] = jnp.ones((c,), jnp.float32)
    return p


def prepare_params(p):
    """One-time parameter prep (hoisted out of the per-call forward):
    * fold inference BN + conv bias into the conv weights/biases,
    * lower each conv into a banded matrix whose columns are channel-major (c*L+l),
      so the PyTorch flatten is the identity and fc1 consumes conv2's output directly,
    * pre-broadcast biases to full lane width,
    * zero-pad H1 250 -> 256 (fc1b pad = 0, fc2 padded rows = 0, so results unchanged).
    """
    # shifts[k, a, b] = 1 iff a == b + k - 1  (conv tap k reads x[l + k - 1]); the
    # missing off-diagonal entries implement the 'same' zero padding.
    shifts = jnp.stack([jnp.eye(L, k=1, dtype=jnp.float32),    # k=0 -> x[l-1]
                        jnp.eye(L, k=0, dtype=jnp.float32),    # k=1 -> x[l]
                        jnp.eye(L, k=-1, dtype=jnp.float32)])  # k=2 -> x[l+1]

    # conv1 + BN1 fold -> (L, C1*L) banded matrix, channel-major output columns.
    scale1 = p["bn1_gamma"] / jnp.sqrt(p["bn1_var"] + EPS)                     # (C1,)
    w1eff = p["conv1_w"][:, 0, :] * scale1[:, None]                            # (C1, 3)
    t1c = p["bn1_beta"] + scale1 * (p["conv1_b"] - p["bn1_mean"])              # (C1,)
    w1big = jnp.einsum("ck,kab->acb", w1eff, shifts).reshape(L, C1 * L)
    t1flat = jnp.repeat(t1c, L).reshape(1, C1 * L)                             # lane-dense bias

    # conv2 + BN2 fold -> (C1*L, C2*L) banded matrix (input & output channel-major).
    scale2 = p["bn2_gamma"] / jnp.sqrt(p["bn2_var"] + EPS)                     # (C2,)
    w2eff = p["conv2_w"] * scale2[:, None, None]                               # (C2, C1, 3)
    t2c = p["bn2_beta"] + scale2 * (p["conv2_b"] - p["bn2_mean"])              # (C2,)
    w2big = jnp.einsum("oik,kab->iaob", w2eff, shifts).reshape(C1 * L, C2 * L)
    t2flat = jnp.repeat(t2c, L).reshape(1, C2 * L)

    # FC layers: transpose + zero-pad H1 to 256 lanes (exact: ReLU(0 + 0) = 0 and the
    # corresponding fc2 rows are zero).
    fc1wT = jnp.zeros((C2 * L, H1PAD), jnp.float32).at[:, :H1].set(p["fc1_w"].T)
    fc1b = jnp.zeros((1, H1PAD), jnp.float32).at[0, :H1].set(p["fc1_b"])
    fc2wT = jnp.zeros((H1PAD, PRED_HORIZON), jnp.float32).at[:H1, :].set(p["fc2_w"].T)
    fc2b = p["fc2_b"].reshape(1, PRED_HORIZON)

    return dict(w1big=w1big, t1flat=t1flat, w2big=w2big, t2flat=t2flat,
                fc1wT=fc1wT, fc1b=fc1b, fc2wT=fc2wT, fc2b=fc2b)


@jax.jit
def cnn1d_model2_forward(prep, x_ncl):
    b = x_ncl.shape[0]                               # (B, 1, L) like PyTorch NCL
    x2d = x_ncl.reshape(b, L).astype(jnp.float32)    # drop the size-1 channel dim
    out = pl.pallas_call(
        _fused_forward_kernel,
        out_shape=jax.ShapeDtypeStruct((b, PRED_HORIZON), jnp.float32),
        grid=(1,),                                   # single invocation: whole batch at once
        in_specs=[
            pl.BlockSpec((b, L), lambda i: (0, 0)),                 # x (batch on sublanes)
            pl.BlockSpec((L, C1 * L), lambda i: (0, 0)),            # conv1 banded weights
            pl.BlockSpec((1, C1 * L), lambda i: (0, 0)),            # conv1/bn1 bias (lane-dense)
            pl.BlockSpec((C1 * L, C2 * L), lambda i: (0, 0)),       # conv2 banded weights
            pl.BlockSpec((1, C2 * L), lambda i: (0, 0)),            # conv2/bn2 bias (lane-dense)
            pl.BlockSpec((C2 * L, H1PAD), lambda i: (0, 0)),        # fc1 weights (H1 padded)
            pl.BlockSpec((1, H1PAD), lambda i: (0, 0)),             # fc1 bias
            pl.BlockSpec((H1PAD, PRED_HORIZON), lambda i: (0, 0)),  # fc2 weights
            pl.BlockSpec((1, PRED_HORIZON), lambda i: (0, 0)),      # fc2 bias
        ],
        out_specs=pl.BlockSpec((b, PRED_HORIZON), lambda i: (0, 0)),
        compiler_params=pltpu.CompilerParams(dimension_semantics=("arbitrary",)),
        cost_estimate=pl.CostEstimate(flops=510_000, transcendentals=0,
                                      bytes_accessed=520_000),
    )(x2d, prep["w1big"], prep["t1flat"], prep["w2big"], prep["t2flat"],
      prep["fc1wT"], prep["fc1b"], prep["fc2wT"], prep["fc2b"])
    return out


# ----------------------- pure-JAX reference (for checking) ------------------

def reference_forward(params, x_ncl):
    def conv_bn_relu(h, w, bconv, gamma, beta, mean, var):
        y = jax.lax.conv_general_dilated(h, w, window_strides=(1,), padding=((1, 1),),
                                         dimension_numbers=("NCH", "OIH", "NCH"))
        y = y + bconv[None, :, None]
        y = (gamma[None, :, None] * (y - mean[None, :, None])
             / jnp.sqrt(var[None, :, None] + EPS) + beta[None, :, None])
        return jax.nn.relu(y)

    h = conv_bn_relu(x_ncl.astype(jnp.float32), params["conv1_w"], params["conv1_b"],
                     params["bn1_gamma"], params["bn1_beta"],
                     params["bn1_mean"], params["bn1_var"])
    h = conv_bn_relu(h, params["conv2_w"], params["conv2_b"],
                     params["bn2_gamma"], params["bn2_beta"],
                     params["bn2_mean"], params["bn2_var"])
    flat = h.reshape(h.shape[0], -1)                                # channel-major, = x.view(B,-1)
    z = jax.nn.relu(flat @ params["fc1_w"].T + params["fc1_b"])
    return z @ params["fc2_w"].T + params["fc2_b"]


if __name__ == "__main__":
    key = jax.random.PRNGKey(0)
    k_param, k_x = jax.random.split(key)
    params = init_params(k_param)
    prep = prepare_params(params)                    # one-time weight prep, outside forward
    x = jax.random.normal(k_x, (B, 1, L), jnp.float32)

    out = cnn1d_model2_forward(prep, x)
    out = jax.block_until_ready(out)
    assert out.shape == (B, PRED_HORIZON) and out.dtype == jnp.float32

    ref = reference_forward(params, x)
    err = float(jnp.max(jnp.abs(out - ref)))
    assert err < 1e-4, f"kernel/reference mismatch: max abs err = {err}"
    print("KERNEL_OK")
</pallas_src>

<mosaic_0001>
module attributes {stable_mosaic.version = 11 : i64} {
  func.func @_fused_forward_kernel(%arg0: i32, %arg1: memref<2x28xf32, #tpu.memory_space<vmem>>, %arg2: memref<28x896xf32, #tpu.memory_space<vmem>>, %arg3: memref<1x896xf32, #tpu.memory_space<vmem>>, %arg4: memref<896x84xf32, #tpu.memory_space<vmem>>, %arg5: memref<1x84xf32, #tpu.memory_space<vmem>>, %arg6: memref<84x256xf32, #tpu.memory_space<vmem>>, %arg7: memref<1x256xf32, #tpu.memory_space<vmem>>, %arg8: memref<256x14xf32, #tpu.memory_space<vmem>>, %arg9: memref<1x14xf32, #tpu.memory_space<vmem>>, %arg10: memref<2x14xf32, #tpu.memory_space<vmem>>) attributes {dimension_semantics = [#tpu.dimension_semantics<arbitrary>], iteration_bounds = array<i64: 1>, scalar_prefetch = 0 : i64, scratch_operands = 0 : i64, tpu.core_type = #tpu.core_type<tc>, window_params = [{pipeline_mode = #tpu.pipeline_mode<synchronous>, transform_indices = @transform_0, window_bounds = array<i64: 2, 28>}, {pipeline_mode = #tpu.pipeline_mode<synchronous>, transform_indices = @transform_1, window_bounds = array<i64: 28, 896>}, {pipeline_mode = #tpu.pipeline_mode<synchronous>, transform_indices = @transform_2, window_bounds = array<i64: 1, 896>}, {pipeline_mode = #tpu.pipeline_mode<synchronous>, transform_indices = @transform_3, window_bounds = array<i64: 896, 84>}, {pipeline_mode = #tpu.pipeline_mode<synchronous>, transform_indices = @transform_4, window_bounds = array<i64: 1, 84>}, {pipeline_mode = #tpu.pipeline_mode<synchronous>, transform_indices = @transform_5, window_bounds = array<i64: 84, 256>}, {pipeline_mode = #tpu.pipeline_mode<synchronous>, transform_indices = @transform_6, window_bounds = array<i64: 1, 256>}, {pipeline_mode = #tpu.pipeline_mode<synchronous>, transform_indices = @transform_7, window_bounds = array<i64: 256, 14>}, {pipeline_mode = #tpu.pipeline_mode<synchronous>, transform_indices = @transform_8, window_bounds = array<i64: 1, 14>}, {pipeline_mode = #tpu.pipeline_mode<synchronous>, transform_indices = @transform_9, window_bounds = array<i64: 2, 14>}]} {
    %c0 = arith.constant 0 : index
    %c0_0 = arith.constant 0 : index
    %0 = vector.load %arg1[%c0, %c0_0] : memref<2x28xf32, #tpu.memory_space<vmem>>, vector<2x28xf32>
    %c0_1 = arith.constant 0 : index
    %c0_2 = arith.constant 0 : index
    %1 = vector.load %arg2[%c0_1, %c0_2] : memref<28x896xf32, #tpu.memory_space<vmem>>, vector<28x896xf32>
    %cst = arith.constant dense<0.000000e+00> : vector<2x896xf32>
    %2 = tpu.matmul %0, %1, %cst {dimension_numbers = #tpu.dot_dimension_numbers<[1], [0], [0], [1], [0, 0, 1, 1], [], []>} : vector<2x28xf32>, vector<28x896xf32>, vector<2x896xf32> -> vector<2x896xf32>
    %c0_3 = arith.constant 0 : index
    %c0_4 = arith.constant 0 : index
    %3 = vector.load %arg3[%c0_3, %c0_4] : memref<1x896xf32, #tpu.memory_space<vmem>>, vector<1x896xf32>
    %4 = vector.broadcast %3 : vector<1x896xf32> to vector<2x896xf32>
    %5 = arith.addf %2, %4 : vector<2x896xf32>
    %cst_5 = arith.constant 0.000000e+00 : f32
    %6 = vector.broadcast %cst_5 : f32 to vector<2x896xf32>
    %7 = arith.maximumf %5, %6 : vector<2x896xf32>
    %c0_6 = arith.constant 0 : index
    %c0_7 = arith.constant 0 : index
    %8 = vector.load %arg4[%c0_6, %c0_7] : memref<896x84xf32, #tpu.memory_space<vmem>>, vector<896x84xf32>
    %cst_8 = arith.constant dense<0.000000e+00> : vector<2x84xf32>
    %9 = tpu.matmul %7, %8, %cst_8 {dimension_numbers = #tpu.dot_dimension_numbers<[1], [0], [0], [1], [0, 0, 1, 1], [], []>} : vector<2x896xf32>, vector<896x84xf32>, vector<2x84xf32> -> vector<2x84xf32>
    %c0_9 = arith.constant 0 : index
    %c0_10 = arith.constant 0 : index
    %10 = vector.load %arg5[%c0_9, %c0_10] : memref<1x84xf32, #tpu.memory_space<vmem>>, vector<1x84xf32>
    %11 = vector.broadcast %10 : vector<1x84xf32> to vector<2x84xf32>
    %12 = arith.addf %9, %11 : vector<2x84xf32>
    %cst_11 = arith.constant 0.000000e+00 : f32
    %13 = vector.broadcast %cst_11 : f32 to vector<2x84xf32>
    %14 = arith.maximumf %12, %13 : vector<2x84xf32>
    %c0_12 = arith.constant 0 : index
    %c0_13 = arith.constant 0 : index
    %15 = vector.load %arg6[%c0_12, %c0_13] : memref<84x256xf32, #tpu.memory_space<vmem>>, vector<84x256xf32>
    %cst_14 = arith.constant dense<0.000000e+00> : vector<2x256xf32>
    %16 = tpu.matmul %14, %15, %cst_14 {dimension_numbers = #tpu.dot_dimension_numbers<[1], [0], [0], [1], [0, 0, 1, 1], [], []>} : vector<2x84xf32>, vector<84x256xf32>, vector<2x256xf32> -> vector<2x256xf32>
    %c0_15 = arith.constant 0 : index
    %c0_16 = arith.constant 0 : index
    %17 = vector.load %arg7[%c0_15, %c0_16] : memref<1x256xf32, #tpu.memory_space<vmem>>, vector<1x256xf32>
    %18 = vector.broadcast %17 : vector<1x256xf32> to vector<2x256xf32>
    %19 = arith.addf %16, %18 : vector<2x256xf32>
    %cst_17 = arith.constant 0.000000e+00 : f32
    %20 = vector.broadcast %cst_17 : f32 to vector<2x256xf32>
    %21 = arith.maximumf %19, %20 : vector<2x256xf32>
    %c0_18 = arith.constant 0 : index
    %c0_19 = arith.constant 0 : index
    %22 = vector.load %arg8[%c0_18, %c0_19] : memref<256x14xf32, #tpu.memory_space<vmem>>, vector<256x14xf32>
    %cst_20 = arith.constant dense<0.000000e+00> : vector<2x14xf32>
    %23 = tpu.matmul %21, %22, %cst_20 {dimension_numbers = #tpu.dot_dimension_numbers<[1], [0], [0], [1], [0, 0, 1, 1], [], []>} : vector<2x256xf32>, vector<256x14xf32>, vector<2x14xf32> -> vector<2x14xf32>
    %c0_21 = arith.constant 0 : index
    %c0_22 = arith.constant 0 : index
    %24 = vector.load %arg9[%c0_21, %c0_22] : memref<1x14xf32, #tpu.memory_space<vmem>>, vector<1x14xf32>
    %25 = vector.broadcast %24 : vector<1x14xf32> to vector<2x14xf32>
    %26 = arith.addf %23, %25 : vector<2x14xf32>
    %c0_23 = arith.constant 0 : index
    %c0_24 = arith.constant 0 : index
    %27 = vector.load %arg10[%c0_23, %c0_24] : memref<2x14xf32, #tpu.memory_space<vmem>>, vector<2x14xf32>
    tpu.vector_store %arg10[%c0_23, %c0_24], %26 {strides = array<i32>} : memref<2x14xf32, #tpu.memory_space<vmem>>, vector<2x14xf32>,
    return
  }
  func.func @transform_0(%arg0: i32) -> (i32, i32) {
    %c0_i32 = arith.constant 0 : i32
    %c0_i32_0 = arith.constant 0 : i32
    %c0_i32_1 = arith.constant 0 : i32
    return %c0_i32, %c0_i32_0 : i32, i32
  }
  func.func @transform_1(%arg0: i32) -> (i32, i32) {
    %c0_i32 = arith.constant 0 : i32
    %c0_i32_0 = arith.constant 0 : i32
    %c0_i32_1 = arith.constant 0 : i32
    return %c0_i32, %c0_i32_0 : i32, i32
  }
  func.func @transform_2(%arg0: i32) -> (i32, i32) {
    %c0_i32 = arith.constant 0 : i32
    %c0_i32_0 = arith.constant 0 : i32
    %c0_i32_1 = arith.constant 0 : i32
    return %c0_i32, %c0_i32_0 : i32, i32
  }
  func.func @transform_3(%arg0: i32) -> (i32, i32) {
    %c0_i32 = arith.constant 0 : i32
    %c0_i32_0 = arith.constant 0 : i32
    %c0_i32_1 = arith.constant 0 : i32
    return %c0_i32, %c0_i32_0 : i32, i32
  }
  func.func @transform_4(%arg0: i32) -> (i32, i32) {
    %c0_i32 = arith.constant 0 : i32
    %c0_i32_0 = arith.constant 0 : i32
    %c0_i32_1 = arith.constant 0 : i32
    return %c0_i32, %c0_i32_0 : i32, i32
  }
  func.func @transform_5(%arg0: i32) -> (i32, i32) {
    %c0_i32 = arith.constant 0 : i32
    %c0_i32_0 = arith.constant 0 : i32
    %c0_i32_1 = arith.constant 0 : i32
    return %c0_i32, %c0_i32_0 : i32, i32
  }
  func.func @transform_6(%arg0: i32) -> (i32, i32) {
    %c0_i32 = arith.constant 0 : i32
    %c0_i32_0 = arith.constant 0 : i32
    %c0_i32_1 = arith.constant 0 : i32
    return %c0_i32, %c0_i32_0 : i32, i32
  }
  func.func @transform_7(%arg0: i32) -> (i32, i32) {
    %c0_i32 = arith.constant 0 : i32
    %c0_i32_0 = arith.constant 0 : i32
    %c0_i32_1 = arith.constant 0 : i32
    return %c0_i32, %c0_i32_0 : i32, i32
  }
  func.func @transform_8(%arg0: i32) -> (i32, i32) {
    %c0_i32 = arith.constant 0 : i32
    %c0_i32_0 = arith.constant 0 : i32
    %c0_i32_1 = arith.constant 0 : i32
    return %c0_i32, %c0_i32_0 : i32, i32
  }
  func.func @transform_9(%arg0: i32) -> (i32, i32) {
    %c0_i32 = arith.constant 0 : i32
    %c0_i32_0 = arith.constant 0 : i32
    %c0_i32_1 = arith.constant 0 : i32
    return %c0_i32, %c0_i32_0 : i32, i32
  }
}

</mosaic_0001>

<llo_original>
// kernel: cnn1d_model2_forward.1
$region0: #{cnn1d_model2_forward.1}
  #allocation0 [shape = 'u32[]', space=smem, size = 0x4, offset = 0x4, fixed_abs, tag = 'smem constant byte address 0x4 - core index']
  #allocation1 [shape = 'u32[72,128]{1,0:T(1,128)}', space=vmem, size = 0x9000, scoped, tag = 'internal scratch']
  %s0 = inlined_call_operand.vmem [shape: f32[2,28], index: 0, kind: input, shape index: {}]
  %s1 = inlined_call_operand.vmem [shape: f32[28,896], index: 1, kind: input, shape index: {}]
  %s2 = inlined_call_operand.vmem [shape: f32[1,896], index: 2, kind: input, shape index: {}]
  %s3 = inlined_call_operand.vmem [shape: f32[896,84], index: 3, kind: input, shape index: {}]
  %s4 = inlined_call_operand.vmem [shape: f32[1,84], index: 4, kind: input, shape index: {}]
  %s5 = inlined_call_operand.vmem [shape: f32[84,256], index: 5, kind: input, shape index: {}]
  %s6 = inlined_call_operand.vmem [shape: f32[1,256], index: 6, kind: input, shape index: {}]
  %s7 = inlined_call_operand.vmem [shape: f32[256,14], index: 7, kind: input, shape index: {}]
  %s8 = inlined_call_operand.vmem [shape: f32[1,14], index: 8, kind: input, shape index: {}]
  %s9 = inlined_call_operand.hbm [shape: f32[2,14], index: 9, kind: output, shape index: {}]
  %s10 = sld [smem:[#allocation0]]
  $region46: #{cnn1d_model2_forward.1} parent=0
    _
  %s12 = ssub.s32 1, %s10
  %s13 = scalar_select 0, %s12, %s10
  $region1: #{cnn1d_model2_forward.1} parent=0
    #allocation2 [shape = 'u8[1024]{0}', space=vmem, size = 0x400, scoped, tag = 'output window, operand 0, single buffered']
    #allocation3 [shape = 's32[1]{0}', space=sflag, size = 0x4, scoped, tag = 'scoped memory for cnn1d_model2_forward.1']
    %14 = vsyncpa [#allocation3], 0
    // Predicated region
    $region2: #{cnn1d_model2_forward.1} parent=1 // pred_check
      _
    $region3: #{cnn1d_model2_forward.1} parent=1 // pred_check_branch
      %16 = sbr.rel (0) target = $region5
    $region4: #{cnn1d_model2_forward.1} parent=1 // pred_region
      _
    $region5: #{cnn1d_model2_forward.1} parent=1 // pred_fallthru
      _
    // Predicated region
    $region6: #{cnn1d_model2_forward.1} parent=1 // pred_check
      _
    $region7: #{cnn1d_model2_forward.1} parent=1 // pred_check_branch
      %18 = sbr.rel (0) target = $region9
    $region8: #{cnn1d_model2_forward.1} parent=1 // pred_region
      _
    $region9: #{cnn1d_model2_forward.1} parent=1 // pred_fallthru
      _
    // Predicated region
    $region10: #{cnn1d_model2_forward.1} parent=1 // pred_check
      _
    $region11: #{cnn1d_model2_forward.1} parent=1 // pred_check_branch
      %20 = sbr.rel (0) target = $region13
    $region12: #{cnn1d_model2_forward.1} parent=1 // pred_region
      _
    $region13: #{cnn1d_model2_forward.1} parent=1 // pred_fallthru
      _
    // Predicated region
    $region14: #{cnn1d_model2_forward.1} parent=1 // pred_check
      _
    $region15: #{cnn1d_model2_forward.1} parent=1 // pred_check_branch
      %22 = sbr.rel (0) target = $region17
    $region16: #{cnn1d_model2_forward.1} parent=1 // pred_region
      _
    $region17: #{cnn1d_model2_forward.1} parent=1 // pred_fallthru
      _
    // Predicated region
    $region18: #{cnn1d_model2_forward.1} parent=1 // pred_check
      _
    $region19: #{cnn1d_model2_forward.1} parent=1 // pred_check_branch
      %24 = sbr.rel (0) target = $region21
    $region20: #{cnn1d_model2_forward.1} parent=1 // pred_region
      _
    $region21: #{cnn1d_model2_forward.1} parent=1 // pred_fallthru
      _
    // Predicated region
    $region22: #{cnn1d_model2_forward.1} parent=1 // pred_check
      _
    $region23: #{cnn1d_model2_forward.1} parent=1 // pred_check_branch
      %26 = sbr.rel (0) target = $region25
    $region24: #{cnn1d_model2_forward.1} parent=1 // pred_region
      _
    $region25: #{cnn1d_model2_forward.1} parent=1 // pred_fallthru
      _
    // Predicated region
    $region26: #{cnn1d_model2_forward.1} parent=1 // pred_check
      _
    $region27: #{cnn1d_model2_forward.1} parent=1 // pred_check_branch
      %28 = sbr.rel (0) target = $region29
    $region28: #{cnn1d_model2_forward.1} parent=1 // pred_region
      _
    $region29: #{cnn1d_model2_forward.1} parent=1 // pred_fallthru
      _
    // Predicated region
    $region30: #{cnn1d_model2_forward.1} parent=1 // pred_check
      _
    $region31: #{cnn1d_model2_forward.1} parent=1 // pred_check_branch
      %30 = sbr.rel (0) target = $region33
    $region32: #{cnn1d_model2_forward.1} parent=1 // pred_region
      _
    $region33: #{cnn1d_model2_forward.1} parent=1 // pred_fallthru
      _
    // Predicated region
    $region34: #{cnn1d_model2_forward.1} parent=1 // pred_check
      _
    $region35: #{cnn1d_model2_forward.1} parent=1 // pred_check_branch
      %32 = sbr.rel (0) target = $region37
    $region36: #{cnn1d_model2_forward.1} parent=1 // pred_region
      _
    $region37: #{cnn1d_model2_forward.1} parent=1 // pred_fallthru
      _
    %v33 = vld [vmem:[%s0] sm:$0x3]
    %v34 = vld [vmem:[%s1] sm:$0xff]
    %v35 = vld [vmem:[%s1 + $0x8] sm:$0xff]
    %v36 = vld [vmem:[%s1 + $0x10] sm:$0xff]
    %v37 = vld [vmem:[%s1 + $0x18] sm:$0xff]
    %v38 = vld [vmem:[%s1 + $0x20] sm:$0xff]
    %v39 = vld [vmem:[%s1 + $0x28] sm:$0xff]
    %v40 = vld [vmem:[%s1 + $0x30] sm:$0xff]
    %v41 = vld [vmem:[%s1 + $0x38] sm:$0xff]
    %v42 = vld [vmem:[%s1 + $0x40] sm:$0xff]
    %v43 = vld [vmem:[%s1 + $0x48] sm:$0xff]
    %v44 = vld [vmem:[%s1 + $0x50] sm:$0xff]
    %v45 = vld [vmem:[%s1 + $0x58] sm:$0xff]
    %v46 = vld [vmem:[%s1 + $0x60] sm:$0xff]
    %v47 = vld [vmem:[%s1 + $0x68] sm:$0xff]
    %v48 = vld [vmem:[%s1 + $0x70] sm:$0xff]
    %v49 = vld [vmem:[%s1 + $0x78] sm:$0xff]
    %v50 = vld [vmem:[%s1 + $0x80] sm:$0xff]
    %v51 = vld [vmem:[%s1 + $0x88] sm:$0xff]
    %v52 = vld [vmem:[%s1 + $0x90] sm:$0xff]
    %v53 = vld [vmem:[%s1 + $0x98] sm:$0xff]
    %v54 = vld [vmem:[%s1 + $0xa0] sm:$0xff]
    %v55 = vld [vmem:[%s1 + $0xa8] sm:$0xf]
    %v56 = vld [vmem:[%s1 + $0xb0] sm:$0xf]
    %v57 = vld [vmem:[%s1 + $0xb8] sm:$0xf]
    %v58 = vld [vmem:[%s1 + $0xc0] sm:$0xf]
    %v59 = vld [vmem:[%s1 + $0xc8] sm:$0xf]
    %v60 = vld [vmem:[%s1 + $0xd0] sm:$0xf]
    %v61 = vld [vmem:[%s1 + $0xd8] sm:$0xf]
    %v62 = vld [vmem:[%s2] sm:$0xff]
    %v64 = vperm.slane %v62, 0
    %v65 = vperm.slane %v62, 1
    %v66 = vperm.slane %v62, 2
    %v67 = vperm.slane %v62, 3
    %v68 = vperm.slane %v62, 4
    %v69 = vperm.slane %v62, 5
    %v70 = vperm.slane %v62, 6
    %vm78 = vcmask 228352
    %v80 = vsel %vm78, %v33, 0
    %vm82 = vcmask 1043456
    %v84 = vsel %vm82, %v55, 0
    %v87 = vsel %vm82, %v56, 0
    %v90 = vsel %vm82, %v57, 0
    %v93 = vsel %vm82, %v58, 0
    %v96 = vsel %vm82, %v59, 0
    %v99 = vsel %vm82, %v60, 0
    %v102 = vsel %vm82, %v61, 0
    %104 = vmatpush.msra.mxu0 0.0
    %105 = vmatpush.msra.mxu0 0.0
    %106 = vmatpush.msra.mxu0 0.0
    %107 = vmatpush.msra.mxu0 0.0
    %108 = vmatpush.msra.mxu0 0.0
    %109 = vmatpush.msra.mxu0 0.0
    %110 = vmatpush.msra.mxu0 0.0
    %111 = vmatpush.msra.mxu0 0.0
    %112 = vmatpush.msra.mxu0 0.0
    %113 = vmatpush.msra.mxu0 0.0
    %114 = vmatpush.msra.mxu0 0.0
    %115 = vmatpush.msra.mxu0 0.0
    %116 = vmatpush.msra.mxu0 %v84
    %117 = vmatpush.msra.mxu0 %v48
    %118 = vmatpush.msra.mxu0 %v41
    %119 = vmatpush.msra.mxu0 %v34
    %120 = vmatmul.f32.gmra.mxu0 %v80
    %v121 = vpop.f32.mrf.mxu0
    %v122 = vadd.f32 %v64, %v121
    %123 = vdwg.mxu0
    %124 = vmatpush.msra.mxu0 0.0
    %125 = vmatpush.msra.mxu0 0.0
    %126 = vmatpush.msra.mxu0 0.0
    %127 = vmatpush.msra.mxu0 0.0
    %128 = vmatpush.msra.mxu0 0.0
    %129 = vmatpush.msra.mxu0 0.0
    %130 = vmatpush.msra.mxu0 0.0
    %131 = vmatpush.msra.mxu0 0.0
    %132 = vmatpush.msra.mxu0 0.0
    %133 = vmatpush.msra.mxu0 0.0
    %134 = vmatpush.msra.mxu0 0.0
    %135 = vmatpush.msra.mxu0 0.0
    %136 = vmatpush.msra.mxu0 %v87
    %137 = vmatpush.msra.mxu0 %v49
    %138 = vmatpush.msra.mxu0 %v42
    %139 = vmatpush.msra.mxu0 %v35
    %140 = vmatmul.f32.gmra.mxu0 %v80
    %v141 = vpop.f32.mrf.mxu0
    %v142 = vadd.f32 %v65, %v141
    %143 = vdwg.mxu0
    %144 = vmatpush.msra.mxu0 0.0
    %145 = vmatpush.msra.mxu0 0.0
    %146 = vmatpush.msra.mxu0 0.0
    %147 = vmatpush.msra.mxu0 0.0
    %148 = vmatpush.msra.mxu0 0.0
    %149 = vmatpush.msra.mxu0 0.0
    %150 = vmatpush.msra.mxu0 0.0
    %151 = vmatpush.msra.mxu0 0.0
    %152 = vmatpush.msra.mxu0 0.0
    %153 = vmatpush.msra.mxu0 0.0
    %154 = vmatpush.msra.mxu0 0.0
    %155 = vmatpush.msra.mxu0 0.0
    %156 = vmatpush.msra.mxu0 %v90
    %157 = vmatpush.msra.mxu0 %v50
    %158 = vmatpush.msra.mxu0 %v43
    %159 = vmatpush.msra.mxu0 %v36
    %160 = vmatmul.f32.gmra.mxu0 %v80
    %v161 = vpop.f32.mrf.mxu0
    %v162 = vadd.f32 %v66, %v161
    %163 = vdwg.mxu0
    %164 = vmatpush.msra.mxu0 0.0
    %165 = vmatpush.msra.mxu0 0.0
    %166 = vmatpush.msra.mxu0 0.0
    %167 = vmatpush.msra.mxu0 0.0
    %168 = vmatpush.msra.mxu0 0.0
    %169 = vmatpush.msra.mxu0 0.0
    %170 = vmatpush.msra.mxu0 0.0
    %171 = vmatpush.msra.mxu0 0.0
    %172 = vmatpush.msra.mxu0 0.0
    %173 = vmatpush.msra.mxu0 0.0
    %174 = vmatpush.msra.mxu0 0.0
    %175 = vmatpush.msra.mxu0 0.0
    %176 = vmatpush.msra.mxu0 %v93
    %177 = vmatpush.msra.mxu0 %v51
    %178 = vmatpush.msra.mxu0 %v44
    %179 = vmatpush.msra.mxu0 %v37
    %180 = vmatmul.f32.gmra.mxu0 %v80
    %v181 = vpop.f32.mrf.mxu0
    %v182 = vadd.f32 %v67, %v181
    %183 = vdwg.mxu0
    %184 = vmatpush.msra.mxu0 0.0
    %185 = vmatpush.msra.mxu0 0.0
    %186 = vmatpush.msra.mxu0 0.0
    %187 = vmatpush.msra.mxu0 0.0
    %188 = vmatpush.msra.mxu0 0.0
    %189 = vmatpush.msra.mxu0 0.0
    %190 = vmatpush.msra.mxu0 0.0
    %191 = vmatpush.msra.mxu0 0.0
    %192 = vmatpush.msra.mxu0 0.0
    %193 = vmatpush.msra.mxu0 0.0
    %194 = vmatpush.msra.mxu0 0.0
    %195 = vmatpush.msra.mxu0 0.0
    %196 = vmatpush.msra.mxu0 %v96
    %197 = vmatpush.msra.mxu0 %v52
    %198 = vmatpush.msra.mxu0 %v45
    %199 = vmatpush.msra.mxu0 %v38
    %200 = vmatmul.f32.gmra.mxu0 %v80
    %v201 = vpop.f32.mrf.mxu0
    %v202 = vadd.f32 %v68, %v201
    %203 = vdwg.mxu0
    %204 = vmatpush.msra.mxu0 0.0
    %205 = vmatpush.msra.mxu0 0.0
    %206 = vmatpush.msra.mxu0 0.0
    %207 = vmatpush.msra.mxu0 0.0
    %208 = vmatpush.msra.mxu0 0.0
    %209 = vmatpush.msra.mxu0 0.0
    %210 = vmatpush.msra.mxu0 0.0
    %211 = vmatpush.msra.mxu0 0.0
    %212 = vmatpush.msra.mxu0 0.0
    %213 = vmatpush.msra.mxu0 0.0
    %214 = vmatpush.msra.mxu0 0.0
    %215 = vmatpush.msra.mxu0 0.0
    %216 = vmatpush.msra.mxu0 %v99
    %217 = vmatpush.msra.mxu0 %v53
    %218 = vmatpush.msra.mxu0 %v46
    %219 = vmatpush.msra.mxu0 %v39
    %220 = vmatmul.f32.gmra.mxu0 %v80
    %v221 = vpop.f32.mrf.mxu0
    %v222 = vadd.f32 %v69, %v221
    %223 = vdwg.mxu0
    %224 = vmatpush.msra.mxu0 0.0
    %225 = vmatpush.msra.mxu0 0.0
    %226 = vmatpush.msra.mxu0 0.0
    %227 = vmatpush.msra.mxu0 0.0
    %228 = vmatpush.msra.mxu0 0.0
    %229 = vmatpush.msra.mxu0 0.0
    %230 = vmatpush.msra.mxu0 0.0
    %231 = vmatpush.msra.mxu0 0.0
    %232 = vmatpush.msra.mxu0 0.0
    %233 = vmatpush.msra.mxu0 0.0
    %234 = vmatpush.msra.mxu0 0.0
    %235 = vmatpush.msra.mxu0 0.0
    %236 = vmatpush.msra.mxu0 %v102
    %237 = vmatpush.msra.mxu0 %v54
    %238 = vmatpush.msra.mxu0 %v47
    %239 = vmatpush.msra.mxu0 %v40
    %240 = vmatmul.f32.gmra.mxu0 %v80
    %v241 = vpop.f32.mrf.mxu0
    %v242 = vadd.f32 %v70, %v241
    %243 = vdwg.mxu0
    %v244 = vmax.f32 %v122, 0.0
    %v245 = vmax.f32 %v142, 0.0
    %v246 = vmax.f32 %v162, 0.0
    %v247 = vmax.f32 %v182, 0.0
    %v248 = vmax.f32 %v202, 0.0
    %v249 = vmax.f32 %v222, 0.0
    %v250 = vmax.f32 %v242, 0.0
    %v251 = vld [vmem:[%s3] sm:$0xff]
    %v252 = vld [vmem:[%s3 + $0x8] sm:$0xff]
    %v253 = vld [vmem:[%s3 + $0x10] sm:$0xff]
    %v254 = vld [vmem:[%s3 + $0x18] sm:$0xff]
    %v255 = vld [vmem:[%s3 + $0x20] sm:$0xff]
    %v256 = vld [vmem:[%s3 + $0x28] sm:$0xff]
    %v257 = vld [vmem:[%s3 + $0x30] sm:$0xff]
    %v258 = vld [vmem:[%s3 + $0x38] sm:$0xff]
    %v259 = vld [vmem:[%s3 + $0x40] sm:$0xff]
    %v260 = vld [vmem:[%s3 + $0x48] sm:$0xff]
    %v261 = vld [vmem:[%s3 + $0x50] sm:$0xff]
    %v262 = vld [vmem:[%s3 + $0x58] sm:$0xff]
    %v263 = vld [vmem:[%s3 + $0x60] sm:$0xff]
    %v264 = vld [vmem:[%s3 + $0x68] sm:$0xff]
    %v265 = vld [vmem:[%s3 + $0x70] sm:$0xff]
    %v266 = vld [vmem:[%s3 + $0x78] sm:$0xff]
    %v267 = vld [vmem:[%s3 + $0x80] sm:$0xff]
    %v268 = vld [vmem:[%s3 + $0x88] sm:$0xff]
    %v269 = vld [vmem:[%s3 + $0x90] sm:$0xff]
    %v270 = vld [vmem:[%s3 + $0x98] sm:$0xff]
    %v271 = vld [vmem:[%s3 + $0xa0] sm:$0xff]
    %v272 = vld [vmem:[%s3 + $0xa8] sm:$0xff]
    %v273 = vld [vmem:[%s3 + $0xb0] sm:$0xff]
    %v274 = vld [vmem:[%s3 + $0xb8] sm:$0xff]
    %v275 = vld [vmem:[%s3 + $0xc0] sm:$0xff]
    %v276 = vld [vmem:[%s3 + $0xc8] sm:$0xff]
    %v277 = vld [vmem:[%s3 + $0xd0] sm:$0xff]
    %v278 = vld [vmem:[%s3 + $0xd8] sm:$0xff]
    %v279 = vld [vmem:[%s3 + $0xe0] sm:$0xff]
    %v280 = vld [vmem:[%s3 + $0xe8] sm:$0xff]
    %v281 = vld [vmem:[%s3 + $0xf0] sm:$0xff]
    %v282 = vld [vmem:[%s3 + $0xf8] sm:$0xff]
    %v283 = vld [vmem:[%s3 + $0x100] sm:$0xff]
    %v284 = vld [vmem:[%s3 + $0x108] sm:$0xff]
    %v285 = vld [vmem:[%s3 + $0x110] sm:$0xff]
    %v286 = vld [vmem:[%s3 + $0x118] sm:$0xff]
    %v287 = vld [vmem:[%s3 + $0x120] sm:$0xff]
    %v288 = vld [vmem:[%s3 + $0x128] sm:$0xff]
    %v289 = vld [vmem:[%s3 + $0x130] sm:$0xff]
    %v290 = vld [vmem:[%s3 + $0x138] sm:$0xff]
    %v291 = vld [vmem:[%s3 + $0x140] sm:$0xff]
    %v292 = vld [vmem:[%s3 + $0x148] sm:$0xff]
    %v293 = vld [vmem:[%s3 + $0x150] sm:$0xff]
    %v294 = vld [vmem:[%s3 + $0x158] sm:$0xff]
    %v295 = vld [vmem:[%s3 + $0x160] sm:$0xff]
    %v296 = vld [vmem:[%s3 + $0x168] sm:$0xff]
    %v297 = vld [vmem:[%s3 + $0x170] sm:$0xff]
    %v298 = vld [vmem:[%s3 + $0x178] sm:$0xff]
    %v299 = vld [vmem:[%s3 + $0x180] sm:$0xff]
    %v300 = vld [vmem:[%s3 + $0x188] sm:$0xff]
    %v301 = vld [vmem:[%s3 + $0x190] sm:$0xff]
    %v302 = vld [vmem:[%s3 + $0x198] sm:$0xff]
    %v303 = vld [vmem:[%s3 + $0x1a0] sm:$0xff]
    %v304 = vld [vmem:[%s3 + $0x1a8] sm:$0xff]
    %v305 = vld [vmem:[%s3 + $0x1b0] sm:$0xff]
    %v306 = vld [vmem:[%s3 + $0x1b8] sm:$0xff]
    %v307 = vld [vmem:[%s3 + $0x1c0] sm:$0xff]
    %v308 = vld [vmem:[%s3 + $0x1c8] sm:$0xff]
    %v309 = vld [vmem:[%s3 + $0x1d0] sm:$0xff]
    %v310 = vld [vmem:[%s3 + $0x1d8] sm:$0xff]
    %v311 = vld [vmem:[%s3 + $0x1e0] sm:$0xff]
    %v312 = vld [vmem:[%s3 + $0x1e8] sm:$0xff]
    %v313 = vld [vmem:[%s3 + $0x1f0] sm:$0xff]
    %v314 = vld [vmem:[%s3 + $0x1f8] sm:$0xff]
    %v315 = vld [vmem:[%s3 + $0x200] sm:$0xff]
    %v316 = vld [vmem:[%s3 + $0x208] sm:$0xff]
    %v317 = vld [vmem:[%s3 + $0x210] sm:$0xff]
    %v318 = vld [vmem:[%s3 + $0x218] sm:$0xff]
    %v319 = vld [vmem:[%s3 + $0x220] sm:$0xff]
    %v320 = vld [vmem:[%s3 + $0x228] sm:$0xff]
    %v321 = vld [vmem:[%s3 + $0x230] sm:$0xff]
    %v322 = vld [vmem:[%s3 + $0x238] sm:$0xff]
    %v323 = vld [vmem:[%s3 + $0x240] sm:$0xff]
    %v324 = vld [vmem:[%s3 + $0x248] sm:$0xff]
    %v325 = vld [vmem:[%s3 + $0x250] sm:$0xff]
    %v326 = vld [vmem:[%s3 + $0x258] sm:$0xff]
    %v327 = vld [vmem:[%s3 + $0x260] sm:$0xff]
    %v328 = vld [vmem:[%s3 + $0x268] sm:$0xff]
    %v329 = vld [vmem:[%s3 + $0x270] sm:$0xff]
    %v330 = vld [vmem:[%s3 + $0x278] sm:$0xff]
    %v331 = vld [vmem:[%s3 + $0x280] sm:$0xff]
    %v332 = vld [vmem:[%s3 + $0x288] sm:$0xff]
    %v333 = vld [vmem:[%s3 + $0x290] sm:$0xff]
    %v334 = vld [vmem:[%s3 + $0x298] sm:$0xff]
    %v335 = vld [vmem:[%s3 + $0x2a0] sm:$0xff]
    %v336 = vld [vmem:[%s3 + $0x2a8] sm:$0xff]
    %v337 = vld [vmem:[%s3 + $0x2b0] sm:$0xff]
    %v338 = vld [vmem:[%s3 + $0x2b8] sm:$0xff]
    %v339 = vld [vmem:[%s3 + $0x2c0] sm:$0xff]
    %v340 = vld [vmem:[%s3 + $0x2c8] sm:$0xff]
    %v341 = vld [vmem:[%s3 + $0x2d0] sm:$0xff]
    %v342 = vld [vmem:[%s3 + $0x2d8] sm:$0xff]
    %v343 = vld [vmem:[%s3 + $0x2e0] sm:$0xff]
    %v344 = vld [vmem:[%s3 + $0x2e8] sm:$0xff]
    %v345 = vld [vmem:[%s3 + $0x2f0] sm:$0xff]
    %v346 = vld [vmem:[%s3 + $0x2f8] sm:$0xff]
    %v347 = vld [vmem:[%s3 + $0x300] sm:$0xff]
    %v348 = vld [vmem:[%s3 + $0x308] sm:$0xff]
    %v349 = vld [vmem:[%s3 + $0x310] sm:$0xff]
    %v350 = vld [vmem:[%s3 + $0x318] sm:$0xff]
    %v351 = vld [vmem:[%s3 + $0x320] sm:$0xff]
    %v352 = vld [vmem:[%s3 + $0x328] sm:$0xff]
    %v353 = vld [vmem:[%s3 + $0x330] sm:$0xff]
    %v354 = vld [vmem:[%s3 + $0x338] sm:$0xff]
    %v355 = vld [vmem:[%s3 + $0x340] sm:$0xff]
    %v356 = vld [vmem:[%s3 + $0x348] sm:$0xff]
    %v357 = vld [vmem:[%s3 + $0x350] sm:$0xff]
    %v358 = vld [vmem:[%s3 + $0x358] sm:$0xff]
    %v359 = vld [vmem:[%s3 + $0x360] sm:$0xff]
    %v360 = vld [vmem:[%s3 + $0x368] sm:$0xff]
    %v361 = vld [vmem:[%s3 + $0x370] sm:$0xff]
    %v362 = vld [vmem:[%s3 + $0x378] sm:$0xff]
    %v363 = vld [vmem:[%s4] sm:$0x1]
    %v365 = vperm.slane %v363, 0
    %367 = vmatpush.msra.mxu0 %v266
    %368 = vmatpush.msra.mxu0 %v265
    %369 = vmatpush.msra.mxu0 %v264
    %370 = vmatpush.msra.mxu0 %v263
    %371 = vmatpush.msra.mxu0 %v262
    %372 = vmatpush.msra.mxu0 %v261
    %373 = vmatpush.msra.mxu0 %v260
    %374 = vmatpush.msra.mxu0 %v259
    %375 = vmatpush.msra.mxu0 %v258
    %376 = vmatpush.msra.mxu0 %v257
    %377 = vmatpush.msra.mxu0 %v256
    %378 = vmatpush.msra.mxu0 %v255
    %379 = vmatpush.msra.mxu0 %v254
    %380 = vmatpush.msra.mxu0 %v253
    %381 = vmatpush.msra.mxu0 %v252
    %382 = vmatpush.msra.mxu0 %v251
    %383 = vmatmul.f32.gmra.mxu0 %v244
    %v384 = vpop.f32.mrf.mxu0
    %v385 = vadd.f32 %v365, %v384
    %386 = vdwg.mxu0
    %387 = vmatpush.msra.mxu0 %v282
    %388 = vmatpush.msra.mxu0 %v281
    %389 = vmatpush.msra.mxu0 %v280
    %390 = vmatpush.msra.mxu0 %v279
    %391 = vmatpush.msra.mxu0 %v278
    %392 = vmatpush.msra.mxu0 %v277
    %393 = vmatpush.msra.mxu0 %v276
    %394 = vmatpush.msra.mxu0 %v275
    %395 = vmatpush.msra.mxu0 %v274
    %396 = vmatpush.msra.mxu0 %v273
    %397 = vmatpush.msra.mxu0 %v272
    %398 = vmatpush.msra.mxu0 %v271
    %399 = vmatpush.msra.mxu0 %v270
    %400 = vmatpush.msra.mxu0 %v269
    %401 = vmatpush.msra.mxu0 %v268
    %402 = vmatpush.msra.mxu0 %v267
    %403 = vmatmul.f32.gmra.mxu0 %v245
    %v404 = vpop.f32.mrf.mxu0
    %v405 = vadd.f32 %v385, %v404
    %406 = vdwg.mxu0
    %407 = vmatpush.msra.mxu0 %v298
    %408 = vmatpush.msra.mxu0 %v297
    %409 = vmatpush.msra.mxu0 %v296
    %410 = vmatpush.msra.mxu0 %v295
    %411 = vmatpush.msra.mxu0 %v294
    %412 = vmatpush.msra.mxu0 %v293
    %413 = vmatpush.msra.mxu0 %v292
    %414 = vmatpush.msra.mxu0 %v291
    %415 = vmatpush.msra.mxu0 %v290
    %416 = vmatpush.msra.mxu0 %v289
    %417 = vmatpush.msra.mxu0 %v288
    %418 = vmatpush.msra.mxu0 %v287
    %419 = vmatpush.msra.mxu0 %v286
    %420 = vmatpush.msra.mxu0 %v285
    %421 = vmatpush.msra.mxu0 %v284
    %422 = vmatpush.msra.mxu0 %v283
    %423 = vmatmul.f32.gmra.mxu0 %v246
    %v424 = vpop.f32.mrf.mxu0
    %v425 = vadd.f32 %v405, %v424
    %426 = vdwg.mxu0
    %427 = vmatpush.msra.mxu0 %v314
    %428 = vmatpush.msra.mxu0 %v313
    %429 = vmatpush.msra.mxu0 %v312
    %430 = vmatpush.msra.mxu0 %v311
    %431 = vmatpush.msra.mxu0 %v310
    %432 = vmatpush.msra.mxu0 %v309
    %433 = vmatpush.msra.mxu0 %v308
    %434 = vmatpush.msra.mxu0 %v307
    %435 = vmatpush.msra.mxu0 %v306
    %436 = vmatpush.msra.mxu0 %v305
    %437 = vmatpush.msra.mxu0 %v304
    %438 = vmatpush.msra.mxu0 %v303
    %439 = vmatpush.msra.mxu0 %v302
    %440 = vmatpush.msra.mxu0 %v301
    %441 = vmatpush.msra.mxu0 %v300
    %442 = vmatpush.msra.mxu0 %v299
    %443 = vmatmul.f32.gmra.mxu0 %v247
    %v444 = vpop.f32.mrf.mxu0
    %v445 = vadd.f32 %v425, %v444
    %446 = vdwg.mxu0
    %447 = vmatpush.msra.mxu0 %v330
    %448 = vmatpush.msra.mxu0 %v329
    %449 = vmatpush.msra.mxu0 %v328
    %450 = vmatpush.msra.mxu0 %v327
    %451 = vmatpush.msra.mxu0 %v326
    %452 = vmatpush.msra.mxu0 %v325
    %453 = vmatpush.msra.mxu0 %v324
    %454 = vmatpush.msra.mxu0 %v323
    %455 = vmatpush.msra.mxu0 %v322
    %456 = vmatpush.msra.mxu0 %v321
    %457 = vmatpush.msra.mxu0 %v320
    %458 = vmatpush.msra.mxu0 %v319
    %459 = vmatpush.msra.mxu0 %v318
    %460 = vmatpush.msra.mxu0 %v317
    %461 = vmatpush.msra.mxu0 %v316
    %462 = vmatpush.msra.mxu0 %v315
    %463 = vmatmul.f32.gmra.mxu0 %v248
    %v464 = vpop.f32.mrf.mxu0
    %v465 = vadd.f32 %v445, %v464
    %466 = vdwg.mxu0
    %467 = vmatpush.msra.mxu0 %v346
    %468 = vmatpush.msra.mxu0 %v345
    %469 = vmatpush.msra.mxu0 %v344
    %470 = vmatpush.msra.mxu0 %v343
    %471 = vmatpush.msra.mxu0 %v342
    %472 = vmatpush.msra.mxu0 %v341
    %473 = vmatpush.msra.mxu0 %v340
    %474 = vmatpush.msra.mxu0 %v339
    %475 = vmatpush.msra.mxu0 %v338
    %476 = vmatpush.msra.mxu0 %v337
    %477 = vmatpush.msra.mxu0 %v336
    %478 = vmatpush.msra.mxu0 %v335
    %479 = vmatpush.msra.mxu0 %v334
    %480 = vmatpush.msra.mxu0 %v333
    %481 = vmatpush.msra.mxu0 %v332
    %482 = vmatpush.msra.mxu0 %v331
    %483 = vmatmul.f32.gmra.mxu0 %v249
    %v484 = vpop.f32.mrf.mxu0
    %v485 = vadd.f32 %v465, %v484
    %486 = vdwg.mxu0
    %487 = vmatpush.msra.mxu0 %v362
    %488 = vmatpush.msra.mxu0 %v361
    %489 = vmatpush.msra.mxu0 %v360
    %490 = vmatpush.msra.mxu0 %v359
    %491 = vmatpush.msra.mxu0 %v358
    %492 = vmatpush.msra.mxu0 %v357
    %493 = vmatpush.msra.mxu0 %v356
    %494 = vmatpush.msra.mxu0 %v355
    %495 = vmatpush.msra.mxu0 %v354
    %496 = vmatpush.msra.mxu0 %v353
    %497 = vmatpush.msra.mxu0 %v352
    %498 = vmatpush.msra.mxu0 %v351
    %499 = vmatpush.msra.mxu0 %v350
    %500 = vmatpush.msra.mxu0 %v349
    %501 = vmatpush.msra.mxu0 %v348
    %502 = vmatpush.msra.mxu0 %v347
    %503 = vmatmul.f32.gmra.mxu0 %v250
    %v504 = vpop.f32.mrf.mxu0
    %v505 = vadd.f32 %v485, %v504
    %506 = vdwg.mxu0
    %v507 = vmax.f32 %v505, 0.0
    %v508 = vld [vmem:[%s5] sm:$0xff]
    %v509 = vld [vmem:[%s5 + $0x8] sm:$0xff]
    %v510 = vld [vmem:[%s5 + $0x10] sm:$0xff]
    %v511 = vld [vmem:[%s5 + $0x18] sm:$0xff]
    %v512 = vld [vmem:[%s5 + $0x20] sm:$0xff]
    %v513 = vld [vmem:[%s5 + $0x28] sm:$0xff]
    %v514 = vld [vmem:[%s5 + $0x30] sm:$0xff]
    %v515 = vld [vmem:[%s5 + $0x38] sm:$0xff]
    %v516 = vld [vmem:[%s5 + $0x40] sm:$0xff]
    %v517 = vld [vmem:[%s5 + $0x48] sm:$0xff]
    %v518 = vld [vmem:[%s5 + $0x50] sm:$0xff]
    %v519 = vld [vmem:[%s5 + $0x58] sm:$0xff]
    %v520 = vld [vmem:[%s5 + $0x60] sm:$0xff]
    %v521 = vld [vmem:[%s5 + $0x68] sm:$0xff]
    %v522 = vld [vmem:[%s5 + $0x70] sm:$0xff]
    %v523 = vld [vmem:[%s5 + $0x78] sm:$0xff]
    %v524 = vld [vmem:[%s5 + $0x80] sm:$0xff]
    %v525 = vld [vmem:[%s5 + $0x88] sm:$0xff]
    %v526 = vld [vmem:[%s5 + $0x90] sm:$0xff]
    %v527 = vld [vmem:[%s5 + $0x98] sm:$0xff]
    %v528 = vld [vmem:[%s5 + $0xa0] sm:$0xf]
    %v529 = vld [vmem:[%s5 + $0xa8] sm:$0xf]
    %v530 = vld [vmem:[%s6] sm:$0x3]
    %v532 = vperm.slane %v530, 0
    %v533 = vperm.slane %v530, 1
    %vm536 = vcmask 687104
    %v538 = vsel %vm536, %v507, 0
    %v541 = vsel %vm82, %v528, 0
    %v544 = vsel %vm82, %v529, 0
    %546 = vmatpush.msra.mxu0 0.0
    %547 = vmatpush.msra.mxu0 0.0
    %548 = vmatpush.msra.mxu0 0.0
    %549 = vmatpush.msra.mxu0 0.0
    %550 = vmatpush.msra.mxu0 0.0
    %551 = vmatpush.msra.mxu0 %v541
    %552 = vmatpush.msra.mxu0 %v526
    %553 = vmatpush.msra.mxu0 %v524
    %554 = vmatpush.msra.mxu0 %v522
    %555 = vmatpush.msra.mxu0 %v520
    %556 = vmatpush.msra.mxu0 %v518
    %557 = vmatpush.msra.mxu0 %v516
    %558 = vmatpush.msra.mxu0 %v514
    %559 = vmatpush.msra.mxu0 %v512
    %560 = vmatpush.msra.mxu0 %v510
    %561 = vmatpush.msra.mxu0 %v508
    %562 = vmatmul.f32.gmra.mxu0 %v538
    %v563 = vpop.f32.mrf.mxu0
    %v564 = vadd.f32 %v532, %v563
    %565 = vdwg.mxu0
    %566 = vmatpush.msra.mxu0 0.0
    %567 = vmatpush.msra.mxu0 0.0
    %568 = vmatpush.msra.mxu0 0.0
    %569 = vmatpush.msra.mxu0 0.0
    %570 = vmatpush.msra.mxu0 0.0
    %571 = vmatpush.msra.mxu0 %v544
    %572 = vmatpush.msra.mxu0 %v527
    %573 = vmatpush.msra.mxu0 %v525
    %574 = vmatpush.msra.mxu0 %v523
    %575 = vmatpush.msra.mxu0 %v521
    %576 = vmatpush.msra.mxu0 %v519
    %577 = vmatpush.msra.mxu0 %v517
    %578 = vmatpush.msra.mxu0 %v515
    %579 = vmatpush.msra.mxu0 %v513
    %580 = vmatpush.msra.mxu0 %v511
    %581 = vmatpush.msra.mxu0 %v509
    %582 = vmatmul.f32.gmra.mxu0 %v538
    %v583 = vpop.f32.mrf.mxu0
    %v584 = vadd.f32 %v533, %v583
    %585 = vdwg.mxu0
    %v586 = vmax.f32 %v564, 0.0
    %v587 = vmax.f32 %v584, 0.0
    %v588 = vld [vmem:[%s7] sm:$0xff]
    %v589 = vld [vmem:[%s7 + $0x8] sm:$0xff]
    %v590 = vld [vmem:[%s7 + $0x10] sm:$0xff]
    %v591 = vld [vmem:[%s7 + $0x18] sm:$0xff]
    %v592 = vld [vmem:[%s7 + $0x20] sm:$0xff]
    %v593 = vld [vmem:[%s7 + $0x28] sm:$0xff]
    %v594 = vld [vmem:[%s7 + $0x30] sm:$0xff]
    %v595 = vld [vmem:[%s7 + $0x38] sm:$0xff]
    %v596 = vld [vmem:[%s7 + $0x40] sm:$0xff]
    %v597 = vld [vmem:[%s7 + $0x48] sm:$0xff]
    %v598 = vld [vmem:[%s7 + $0x50] sm:$0xff]
    %v599 = vld [vmem:[%s7 + $0x58] sm:$0xff]
    %v600 = vld [vmem:[%s7 + $0x60] sm:$0xff]
    %v601 = vld [vmem:[%s7 + $0x68] sm:$0xff]
    %v602 = vld [vmem:[%s7 + $0x70] sm:$0xff]
    %v603 = vld [vmem:[%s7 + $0x78] sm:$0xff]
    %v604 = vld [vmem:[%s7 + $0x80] sm:$0xff]
    %v605 = vld [vmem:[%s7 + $0x88] sm:$0xff]
    %v606 = vld [vmem:[%s7 + $0x90] sm:$0xff]
    %v607 = vld [vmem:[%s7 + $0x98] sm:$0xff]
    %v608 = vld [vmem:[%s7 + $0xa0] sm:$0xff]
    %v609 = vld [vmem:[%s7 + $0xa8] sm:$0xff]
    %v610 = vld [vmem:[%s7 + $0xb0] sm:$0xff]
    %v611 = vld [vmem:[%s7 + $0xb8] sm:$0xff]
    %v612 = vld [vmem:[%s7 + $0xc0] sm:$0xff]
    %v613 = vld [vmem:[%s7 + $0xc8] sm:$0xff]
    %v614 = vld [vmem:[%s7 + $0xd0] sm:$0xff]
    %v615 = vld [vmem:[%s7 + $0xd8] sm:$0xff]
    %v616 = vld [vmem:[%s7 + $0xe0] sm:$0xff]
    %v617 = vld [vmem:[%s7 + $0xe8] sm:$0xff]
    %v618 = vld [vmem:[%s7 + $0xf0] sm:$0xff]
    %v619 = vld [vmem:[%s7 + $0xf8] sm:$0xff]
    %v620 = vld [vmem:[%s8] sm:$0x1]
    %v622 = vperm.slane %v620, 0
    %624 = vmatpush.msra.mxu0 %v603
    %625 = vmatpush.msra.mxu0 %v602
    %626 = vmatpush.msra.mxu0 %v601
    %627 = vmatpush.msra.mxu0 %v600
    %628 = vmatpush.msra.mxu0 %v599
    %629 = vmatpush.msra.mxu0 %v598
    %630 = vmatpush.msra.mxu0 %v597
    %631 = vmatpush.msra.mxu0 %v596
    %632 = vmatpush.msra.mxu0 %v595
    %633 = vmatpush.msra.mxu0 %v594
    %634 = vmatpush.msra.mxu0 %v593
    %635 = vmatpush.msra.mxu0 %v592
    %636 = vmatpush.msra.mxu0 %v591
    %637 = vmatpush.msra.mxu0 %v590
    %638 = vmatpush.msra.mxu0 %v589
    %639 = vmatpush.msra.mxu0 %v588
    %640 = vmatmul.f32.gmra.mxu0 %v586
    %v641 = vpop.f32.mrf.mxu0
    %v642 = vadd.f32 %v622, %v641
    %643 = vdwg.mxu0
    %644 = vmatpush.msra.mxu0 %v619
    %645 = vmatpush.msra.mxu0 %v618
    %646 = vmatpush.msra.mxu0 %v617
    %647 = vmatpush.msra.mxu0 %v616
    %648 = vmatpush.msra.mxu0 %v615
    %649 = vmatpush.msra.mxu0 %v614
    %650 = vmatpush.msra.mxu0 %v613
    %651 = vmatpush.msra.mxu0 %v612
    %652 = vmatpush.msra.mxu0 %v611
    %653 = vmatpush.msra.mxu0 %v610
    %654 = vmatpush.msra.mxu0 %v609
    %655 = vmatpush.msra.mxu0 %v608
    %656 = vmatpush.msra.mxu0 %v607
    %657 = vmatpush.msra.mxu0 %v606
    %658 = vmatpush.msra.mxu0 %v605
    %659 = vmatpush.msra.mxu0 %v604
    %660 = vmatmul.f32.gmra.mxu0 %v587
    %v661 = vpop.f32.mrf.mxu0
    %v662 = vadd.f32 %v642, %v661
    %663 = vdwg.mxu0
    %vm664 = vcmask 107520
    %665 = vst.msk [vmem:[#allocation2] sm:$0x3] %vm664, %v662
    // Predicated region
    $region38: #{cnn1d_model2_forward.1} parent=1 // pred_check
      _
    $region39: #{cnn1d_model2_forward.1} parent=1 // pred_check_branch
      %667 = sbr.rel (0) target = $region41
    $region40: #{cnn1d_model2_forward.1} parent=1 // pred_region
      %669 = vsyncadd [#allocation3], 0
      %s671 = sshll.u32 [#allocation2], 4
      %s672 = int_to_ptr.vmem [resolvable:$true] %s671
      %s673 = sshll.u32 %s9, 4
      %s674 = int_to_ptr.hbm [resolvable:$true] %s673
      %676 = dma.vmem_to_hbm [thread:$0]  %s672, 32, %s674, [#allocation3]
    $region41: #{cnn1d_model2_forward.1} parent=1 // pred_fallthru
      _
    // Predicated region
    $region42: #{cnn1d_model2_forward.1} parent=1 // pred_check
      _
    $region43: #{cnn1d_model2_forward.1} parent=1 // pred_check_branch
      %678 = sbr.rel (0) target = $region45
    $region44: #{cnn1d_model2_forward.1} parent=1 // pred_region
      %680 = dma.done [#allocation3], 32
    $region45: #{cnn1d_model2_forward.1} parent=1 // pred_fallthru
      _
    %681 = vsyncpa [#allocation3], 1

</llo_original>
